<compile_context>
chip_gen: v6e
topology: v6e:2x2x1
jax: 0.10.0
libtpu: 0.0.40
codegen_flags: <defaults>
</compile_context>

<pallas_src>
import functools

import jax
import jax.numpy as jnp
from jax.experimental import pallas as pl
from jax.experimental.pallas import tpu as pltpu

_LANE = 128      # lane width (last dim)
_SUBLANE = 8     # sublane width (second-to-last dim)


def _round_up(n, m):
    return (n + m - 1) // m * m


def _leaky_relu(x, slope=0.2):
    return jnp.where(x > 0, x, slope * x)


def _pad2(a, rows, cols):
    r, c = a.shape
    return jnp.pad(a, ((0, rows - r), (0, cols - c)))


def generator_kernel(x_ref,
                     w1_ref, b1_ref,
                     w2_ref, b2_ref,
                     w3_ref, b3_ref,
                     w4_ref, b4_ref,
                     o_ref):
    # Fused 4-layer MLP: bf16 MXU matmuls with f32 accumulation, VPU
    # leaky-relu / tanh in f32, single direct output store.
    x = x_ref[...].astype(jnp.bfloat16)   # in-kernel cast: no HBM pad/cast pass
    h = jnp.dot(x, w1_ref[...], preferred_element_type=jnp.float32)
    h = _leaky_relu(h + b1_ref[...])
    # TODO(synk): training-mode stochastic dropout (p=0.3) not implemented
    # (eval-mode identity, matching model.eval()).

    h = jnp.dot(h.astype(jnp.bfloat16), w2_ref[...],
                preferred_element_type=jnp.float32)
    h = _leaky_relu(h + b2_ref[...])

    h = jnp.dot(h.astype(jnp.bfloat16), w3_ref[...],
                preferred_element_type=jnp.float32)
    h = _leaky_relu(h + b3_ref[...])

    h = jnp.dot(h.astype(jnp.bfloat16), w4_ref[...],
                preferred_element_type=jnp.float32)
    o_ref[...] = jnp.tanh(h + b4_ref[...]).astype(o_ref.dtype)


@functools.partial(jax.jit, static_argnames=("block_b", "out_dtype"))
def generator_forward(x, params, block_b=512, out_dtype=jnp.bfloat16):
    """x: [B, input_size]; params: dict of w1..w4 ([in,out]) and b1..b4 ([1,out])."""
    B, in_size = x.shape
    d1 = params["w1"].shape[1]
    d2 = params["w2"].shape[1]
    d3 = params["w3"].shape[1]
    out_size = params["w4"].shape[1]

    # Pad only the hidden feature dims to 128 lanes (lane-dense intermediate
    # activations / matmul operands).  Input K and output N keep their natural
    # sizes: BlockSpec dims equal to the full array dim satisfy the (8,128)
    # rule, and small-K / small-N matmuls are handled by the MXU lowering.
    d1_p = _round_up(d1, _LANE)
    d2_p = _round_up(d2, _LANE)
    d3_p = _round_up(d3, _LANE)

    # bf16 weights (MXU-native); f32 biases added onto the f32 accumulator.
    # (For repeated calls these tiny pads/casts could be hoisted out by
    # pre-padding the params once; negligible next to the activation streams.)
    bf16 = jnp.bfloat16
    w1 = _pad2(params["w1"].astype(bf16), in_size, d1_p)
    w2 = _pad2(params["w2"].astype(bf16), d1_p, d2_p)
    w3 = _pad2(params["w3"].astype(bf16), d2_p, d3_p)
    w4 = _pad2(params["w4"].astype(bf16), d3_p, out_size)
    b1 = _pad2(params["b1"].astype(jnp.float32), 1, d1_p)
    b2 = _pad2(params["b2"].astype(jnp.float32), 1, d2_p)
    b3 = _pad2(params["b3"].astype(jnp.float32), 1, d3_p)
    b4 = params["b4"].astype(jnp.float32)

    # Batch tiling: sanitize the tile to a sublane multiple, never pad tiny
    # batches past the sublane, handle ragged tails via cdiv + masked writes,
    # and force >=2 grid steps for large batches (both TCs on v7x).
    block_b = max(_SUBLANE, _round_up(int(block_b), _SUBLANE))
    blk = min(block_b, _round_up(B, _SUBLANE))
    if B > 256 and pl.cdiv(B, blk) < 2:
        blk = _round_up(pl.cdiv(B, 2), _SUBLANE)
    grid = (pl.cdiv(B, blk),)

    def fixed(shape):
        # Constant block index -> fetched once, stays VMEM-resident.
        return pl.BlockSpec(shape, lambda i: (0, 0))

    out = pl.pallas_call(
        generator_kernel,
        out_shape=jax.ShapeDtypeStruct((B, out_size), out_dtype),
        grid_spec=pltpu.PrefetchScalarGridSpec(
            num_scalar_prefetch=0,
            grid=grid,
            in_specs=[pl.BlockSpec((blk, in_size), lambda i: (i, 0)),
                      fixed(w1.shape), fixed(b1.shape),
                      fixed(w2.shape), fixed(b2.shape),
                      fixed(w3.shape), fixed(b3.shape),
                      fixed(w4.shape), fixed(b4.shape)],
            out_specs=pl.BlockSpec((blk, out_size), lambda i: (i, 0)),
        ),
        compiler_params=pltpu.CompilerParams(
            # "parallel" batch axis (megacore-shardable); safe on 1-TC chips.
            dimension_semantics=("parallel",),
            # Weights ~hundreds of KB, tiles <~1 MB double-buffered: plenty of
            # headroom on every generation (incl. v7x's 64 MiB physical VMEM).
            vmem_limit_bytes=32 * 1024 * 1024,
        ),
    )(x, w1, b1, w2, b2, w3, b3, w4, b4)

    return out


def init_params(key, input_size, hidden_dim, output_size, dtype=jnp.float32):
    """Deterministic synthetic init mirroring nn.Linear shapes.

    Weights stored as [in_features, out_features]; biases as [1, out_features].
    """
    dims = [(input_size, hidden_dim),
            (hidden_dim, hidden_dim * 2),
            (hidden_dim * 2, hidden_dim * 4),
            (hidden_dim * 4, output_size)]
    params = {}
    for idx, (din, dout) in enumerate(dims, start=1):
        key, kw, kb = jax.random.split(key, 3)
        bound = 1.0 / jnp.sqrt(din)
        params[f"w{idx}"] = jax.random.uniform(
            kw, (din, dout), dtype, minval=-bound, maxval=bound)
        params[f"b{idx}"] = jax.random.uniform(
            kb, (1, dout), dtype, minval=-bound, maxval=bound)
    return params


def reference_forward(x, params):
    h = x
    for i in (1, 2, 3):
        h = h @ params[f"w{i}"] + params[f"b{i}"]
        h = jnp.where(h > 0, h, 0.2 * h)
    return jnp.tanh(h @ params["w4"] + params["b4"])


if __name__ == "__main__":
    key = jax.random.PRNGKey(0)
    input_size, hidden_dim, output_size = 16, 32, 16
    batch = 8

    kx, kp = jax.random.split(key)
    x = jax.random.normal(kx, (batch, input_size), jnp.float32)
    params = init_params(kp, input_size, hidden_dim, output_size)

    out = generator_forward(x, params)        # defaults: block_b=512, bf16 out
    out = jax.block_until_ready(out)

    ref = reference_forward(x, params)         # f32 reference
    assert out.shape == (batch, output_size), out.shape
    # bf16 MXU inputs + bf16 output store -> loosen tolerance vs f32 reference.
    max_err = jnp.max(jnp.abs(out.astype(jnp.float32) - ref))
    assert jnp.allclose(out.astype(jnp.float32), ref, atol=4e-2, rtol=0), (
        f"max err {max_err}")

    print("KERNEL_OK")
</pallas_src>

<mosaic_0001>
module attributes {stable_mosaic.version = 11 : i64} {
  func.func @generator_kernel(%arg0: i32, %arg1: memref<8x16xf32, #tpu.memory_space<vmem>>, %arg2: memref<16x128xbf16, #tpu.memory_space<vmem>>, %arg3: memref<1x128xf32, #tpu.memory_space<vmem>>, %arg4: memref<128x128xbf16, #tpu.memory_space<vmem>>, %arg5: memref<1x128xf32, #tpu.memory_space<vmem>>, %arg6: memref<128x128xbf16, #tpu.memory_space<vmem>>, %arg7: memref<1x128xf32, #tpu.memory_space<vmem>>, %arg8: memref<128x16xbf16, #tpu.memory_space<vmem>>, %arg9: memref<1x16xf32, #tpu.memory_space<vmem>>, %arg10: memref<8x16xbf16, #tpu.memory_space<vmem>>) attributes {dimension_semantics = [#tpu.dimension_semantics<parallel>], iteration_bounds = array<i64: 1>, scalar_prefetch = 0 : i64, scratch_operands = 0 : i64, tpu.core_type = #tpu.core_type<tc>, window_params = [{transform_indices = @transform_0, window_bounds = array<i64: 8, 16>}, {pipeline_mode = #tpu.pipeline_mode<synchronous>, transform_indices = @transform_1, window_bounds = array<i64: 16, 128>}, {pipeline_mode = #tpu.pipeline_mode<synchronous>, transform_indices = @transform_2, window_bounds = array<i64: 1, 128>}, {pipeline_mode = #tpu.pipeline_mode<synchronous>, transform_indices = @transform_3, window_bounds = array<i64: 128, 128>}, {pipeline_mode = #tpu.pipeline_mode<synchronous>, transform_indices = @transform_4, window_bounds = array<i64: 1, 128>}, {pipeline_mode = #tpu.pipeline_mode<synchronous>, transform_indices = @transform_5, window_bounds = array<i64: 128, 128>}, {pipeline_mode = #tpu.pipeline_mode<synchronous>, transform_indices = @transform_6, window_bounds = array<i64: 1, 128>}, {pipeline_mode = #tpu.pipeline_mode<synchronous>, transform_indices = @transform_7, window_bounds = array<i64: 128, 16>}, {pipeline_mode = #tpu.pipeline_mode<synchronous>, transform_indices = @transform_8, window_bounds = array<i64: 1, 16>}, {transform_indices = @transform_9, window_bounds = array<i64: 8, 16>}]} {
    %c0 = arith.constant 0 : index
    %c0_0 = arith.constant 0 : index
    %0 = vector.load %arg1[%c0, %c0_0] : memref<8x16xf32, #tpu.memory_space<vmem>>, vector<8x16xf32>
    %1 = arith.truncf %0 : vector<8x16xf32> to vector<8x16xbf16>
    %c0_1 = arith.constant 0 : index
    %c0_2 = arith.constant 0 : index
    %2 = vector.load %arg2[%c0_1, %c0_2] : memref<16x128xbf16, #tpu.memory_space<vmem>>, vector<16x128xbf16>
    %cst = arith.constant dense<0.000000e+00> : vector<8x128xf32>
    %3 = tpu.matmul %1, %2, %cst {dimension_numbers = #tpu.dot_dimension_numbers<[1], [0], [0], [1], [0, 0, 1, 1], [], []>} : vector<8x16xbf16>, vector<16x128xbf16>, vector<8x128xf32> -> vector<8x128xf32>
    %c0_3 = arith.constant 0 : index
    %c0_4 = arith.constant 0 : index
    %4 = vector.load %arg3[%c0_3, %c0_4] : memref<1x128xf32, #tpu.memory_space<vmem>>, vector<1x128xf32>
    %5 = vector.broadcast %4 : vector<1x128xf32> to vector<8x128xf32>
    %6 = arith.addf %3, %5 : vector<8x128xf32>
    %cst_5 = arith.constant 0.000000e+00 : f32
    %7 = vector.broadcast %cst_5 : f32 to vector<8x128xf32>
    %8 = arith.cmpf ogt, %6, %7 : vector<8x128xf32>
    %cst_6 = arith.constant 2.000000e-01 : f32
    %9 = vector.broadcast %cst_6 : f32 to vector<8x128xf32>
    %10 = arith.mulf %9, %6 : vector<8x128xf32>
    %11 = arith.select %8, %6, %10 : vector<8x128xi1>, vector<8x128xf32>
    %12 = arith.truncf %11 : vector<8x128xf32> to vector<8x128xbf16>
    %c0_7 = arith.constant 0 : index
    %c0_8 = arith.constant 0 : index
    %13 = vector.load %arg4[%c0_7, %c0_8] : memref<128x128xbf16, #tpu.memory_space<vmem>>, vector<128x128xbf16>
    %cst_9 = arith.constant dense<0.000000e+00> : vector<8x128xf32>
    %14 = tpu.matmul %12, %13, %cst_9 {dimension_numbers = #tpu.dot_dimension_numbers<[1], [0], [0], [1], [0, 0, 1, 1], [], []>} : vector<8x128xbf16>, vector<128x128xbf16>, vector<8x128xf32> -> vector<8x128xf32>
    %c0_10 = arith.constant 0 : index
    %c0_11 = arith.constant 0 : index
    %15 = vector.load %arg5[%c0_10, %c0_11] : memref<1x128xf32, #tpu.memory_space<vmem>>, vector<1x128xf32>
    %16 = vector.broadcast %15 : vector<1x128xf32> to vector<8x128xf32>
    %17 = arith.addf %14, %16 : vector<8x128xf32>
    %cst_12 = arith.constant 0.000000e+00 : f32
    %18 = vector.broadcast %cst_12 : f32 to vector<8x128xf32>
    %19 = arith.cmpf ogt, %17, %18 : vector<8x128xf32>
    %cst_13 = arith.constant 2.000000e-01 : f32
    %20 = vector.broadcast %cst_13 : f32 to vector<8x128xf32>
    %21 = arith.mulf %20, %17 : vector<8x128xf32>
    %22 = arith.select %19, %17, %21 : vector<8x128xi1>, vector<8x128xf32>
    %23 = arith.truncf %22 : vector<8x128xf32> to vector<8x128xbf16>
    %c0_14 = arith.constant 0 : index
    %c0_15 = arith.constant 0 : index
    %24 = vector.load %arg6[%c0_14, %c0_15] : memref<128x128xbf16, #tpu.memory_space<vmem>>, vector<128x128xbf16>
    %cst_16 = arith.constant dense<0.000000e+00> : vector<8x128xf32>
    %25 = tpu.matmul %23, %24, %cst_16 {dimension_numbers = #tpu.dot_dimension_numbers<[1], [0], [0], [1], [0, 0, 1, 1], [], []>} : vector<8x128xbf16>, vector<128x128xbf16>, vector<8x128xf32> -> vector<8x128xf32>
    %c0_17 = arith.constant 0 : index
    %c0_18 = arith.constant 0 : index
    %26 = vector.load %arg7[%c0_17, %c0_18] : memref<1x128xf32, #tpu.memory_space<vmem>>, vector<1x128xf32>
    %27 = vector.broadcast %26 : vector<1x128xf32> to vector<8x128xf32>
    %28 = arith.addf %25, %27 : vector<8x128xf32>
    %cst_19 = arith.constant 0.000000e+00 : f32
    %29 = vector.broadcast %cst_19 : f32 to vector<8x128xf32>
    %30 = arith.cmpf ogt, %28, %29 : vector<8x128xf32>
    %cst_20 = arith.constant 2.000000e-01 : f32
    %31 = vector.broadcast %cst_20 : f32 to vector<8x128xf32>
    %32 = arith.mulf %31, %28 : vector<8x128xf32>
    %33 = arith.select %30, %28, %32 : vector<8x128xi1>, vector<8x128xf32>
    %34 = arith.truncf %33 : vector<8x128xf32> to vector<8x128xbf16>
    %c0_21 = arith.constant 0 : index
    %c0_22 = arith.constant 0 : index
    %35 = vector.load %arg8[%c0_21, %c0_22] : memref<128x16xbf16, #tpu.memory_space<vmem>>, vector<128x16xbf16>
    %cst_23 = arith.constant dense<0.000000e+00> : vector<8x16xf32>
    %36 = tpu.matmul %34, %35, %cst_23 {dimension_numbers = #tpu.dot_dimension_numbers<[1], [0], [0], [1], [0, 0, 1, 1], [], []>} : vector<8x128xbf16>, vector<128x16xbf16>, vector<8x16xf32> -> vector<8x16xf32>
    %c0_24 = arith.constant 0 : index
    %c0_25 = arith.constant 0 : index
    %37 = vector.load %arg9[%c0_24, %c0_25] : memref<1x16xf32, #tpu.memory_space<vmem>>, vector<1x16xf32>
    %38 = vector.broadcast %37 : vector<1x16xf32> to vector<8x16xf32>
    %39 = arith.addf %36, %38 : vector<8x16xf32>
    %40 = math.tanh %39 : vector<8x16xf32>
    %41 = arith.truncf %40 : vector<8x16xf32> to vector<8x16xbf16>
    %c0_26 = arith.constant 0 : index
    %c0_27 = arith.constant 0 : index
    %42 = vector.load %arg10[%c0_26, %c0_27] : memref<8x16xbf16, #tpu.memory_space<vmem>>, vector<8x16xbf16>
    tpu.vector_store %arg10[%c0_26, %c0_27], %41 {strides = array<i32>} : memref<8x16xbf16, #tpu.memory_space<vmem>>, vector<8x16xbf16>,
    return
  }
  func.func @transform_0(%arg0: i32) -> (i32, i32) {
    %c0_i32 = arith.constant 0 : i32
    %c0_i32_0 = arith.constant 0 : i32
    return %arg0, %c0_i32 : i32, i32
  }
  func.func @transform_1(%arg0: i32) -> (i32, i32) {
    %c0_i32 = arith.constant 0 : i32
    %c0_i32_0 = arith.constant 0 : i32
    %c0_i32_1 = arith.constant 0 : i32
    return %c0_i32, %c0_i32_0 : i32, i32
  }
  func.func @transform_2(%arg0: i32) -> (i32, i32) {
    %c0_i32 = arith.constant 0 : i32
    %c0_i32_0 = arith.constant 0 : i32
    %c0_i32_1 = arith.constant 0 : i32
    return %c0_i32, %c0_i32_0 : i32, i32
  }
  func.func @transform_3(%arg0: i32) -> (i32, i32) {
    %c0_i32 = arith.constant 0 : i32
    %c0_i32_0 = arith.constant 0 : i32
    %c0_i32_1 = arith.constant 0 : i32
    return %c0_i32, %c0_i32_0 : i32, i32
  }
  func.func @transform_4(%arg0: i32) -> (i32, i32) {
    %c0_i32 = arith.constant 0 : i32
    %c0_i32_0 = arith.constant 0 : i32
    %c0_i32_1 = arith.constant 0 : i32
    return %c0_i32, %c0_i32_0 : i32, i32
  }
  func.func @transform_5(%arg0: i32) -> (i32, i32) {
    %c0_i32 = arith.constant 0 : i32
    %c0_i32_0 = arith.constant 0 : i32
    %c0_i32_1 = arith.constant 0 : i32
    return %c0_i32, %c0_i32_0 : i32, i32
  }
  func.func @transform_6(%arg0: i32) -> (i32, i32) {
    %c0_i32 = arith.constant 0 : i32
    %c0_i32_0 = arith.constant 0 : i32
    %c0_i32_1 = arith.constant 0 : i32
    return %c0_i32, %c0_i32_0 : i32, i32
  }
  func.func @transform_7(%arg0: i32) -> (i32, i32) {
    %c0_i32 = arith.constant 0 : i32
    %c0_i32_0 = arith.constant 0 : i32
    %c0_i32_1 = arith.constant 0 : i32
    return %c0_i32, %c0_i32_0 : i32, i32
  }
  func.func @transform_8(%arg0: i32) -> (i32, i32) {
    %c0_i32 = arith.constant 0 : i32
    %c0_i32_0 = arith.constant 0 : i32
    %c0_i32_1 = arith.constant 0 : i32
    return %c0_i32, %c0_i32_0 : i32, i32
  }
  func.func @transform_9(%arg0: i32) -> (i32, i32) {
    %c0_i32 = arith.constant 0 : i32
    %c0_i32_0 = arith.constant 0 : i32
    return %arg0, %c0_i32 : i32, i32
  }
}

</mosaic_0001>

<llo_original>
// kernel: generator_forward.1
$region0: #{generator_forward.1}
  #allocation0 [shape = 'u32[]', space=smem, size = 0x4, offset = 0x4, fixed_abs, tag = 'smem constant byte address 0x4 - core index']
  #allocation1 [shape = 'u32[144,128]{1,0:T(1,128)}', space=vmem, size = 0x12000, scoped, tag = 'internal scratch']
  %s0 = inlined_call_operand.vmem [shape: f32[8,16], index: 0, kind: input, shape index: {}]
  %s1 = inlined_call_operand.vmem [shape: bf16[16,128], index: 1, kind: input, shape index: {}]
  %s2 = inlined_call_operand.vmem [shape: f32[1,128], index: 2, kind: input, shape index: {}]
  %s3 = inlined_call_operand.vmem [shape: bf16[128,128], index: 3, kind: input, shape index: {}]
  %s4 = inlined_call_operand.vmem [shape: f32[1,128], index: 4, kind: input, shape index: {}]
  %s5 = inlined_call_operand.vmem [shape: bf16[128,128], index: 5, kind: input, shape index: {}]
  %s6 = inlined_call_operand.vmem [shape: f32[1,128], index: 6, kind: input, shape index: {}]
  %s7 = inlined_call_operand.vmem [shape: bf16[128,16], index: 7, kind: input, shape index: {}]
  %s8 = inlined_call_operand.vmem [shape: f32[1,16], index: 8, kind: input, shape index: {}]
  %s9 = inlined_call_operand.hbm [shape: bf16[8,16], index: 9, kind: output, shape index: {}]
  %s10 = sld [smem:[#allocation0]]
  $region46: #{generator_forward.1} parent=0
    _
  %s12 = ssub.s32 1, %s10
  %s13 = scalar_select 0, %s12, %s10
  $region1: #{generator_forward.1} parent=0
    #allocation2 [shape = 'u8[2048]{0}', space=vmem, size = 0x800, scoped, tag = 'output window, operand 0, single buffered']
    #allocation3 [shape = 's32[1]{0}', space=sflag, size = 0x4, scoped, tag = 'scoped memory for generator_forward.1']
    %14 = vsyncpa [#allocation3], 0
    // Predicated region
    $region2: #{generator_forward.1} parent=1 // pred_check
      _
    $region3: #{generator_forward.1} parent=1 // pred_check_branch
      %16 = sbr.rel (0) target = $region5
    $region4: #{generator_forward.1} parent=1 // pred_region
      _
    $region5: #{generator_forward.1} parent=1 // pred_fallthru
      _
    // Predicated region
    $region6: #{generator_forward.1} parent=1 // pred_check
      _
    $region7: #{generator_forward.1} parent=1 // pred_check_branch
      %18 = sbr.rel (0) target = $region9
    $region8: #{generator_forward.1} parent=1 // pred_region
      _
    $region9: #{generator_forward.1} parent=1 // pred_fallthru
      _
    // Predicated region
    $region10: #{generator_forward.1} parent=1 // pred_check
      _
    $region11: #{generator_forward.1} parent=1 // pred_check_branch
      %20 = sbr.rel (0) target = $region13
    $region12: #{generator_forward.1} parent=1 // pred_region
      _
    $region13: #{generator_forward.1} parent=1 // pred_fallthru
      _
    // Predicated region
    $region14: #{generator_forward.1} parent=1 // pred_check
      _
    $region15: #{generator_forward.1} parent=1 // pred_check_branch
      %22 = sbr.rel (0) target = $region17
    $region16: #{generator_forward.1} parent=1 // pred_region
      _
    $region17: #{generator_forward.1} parent=1 // pred_fallthru
      _
    // Predicated region
    $region18: #{generator_forward.1} parent=1 // pred_check
      _
    $region19: #{generator_forward.1} parent=1 // pred_check_branch
      %24 = sbr.rel (0) target = $region21
    $region20: #{generator_forward.1} parent=1 // pred_region
      _
    $region21: #{generator_forward.1} parent=1 // pred_fallthru
      _
    // Predicated region
    $region22: #{generator_forward.1} parent=1 // pred_check
      _
    $region23: #{generator_forward.1} parent=1 // pred_check_branch
      %26 = sbr.rel (0) target = $region25
    $region24: #{generator_forward.1} parent=1 // pred_region
      _
    $region25: #{generator_forward.1} parent=1 // pred_fallthru
      _
    // Predicated region
    $region26: #{generator_forward.1} parent=1 // pred_check
      _
    $region27: #{generator_forward.1} parent=1 // pred_check_branch
      %28 = sbr.rel (0) target = $region29
    $region28: #{generator_forward.1} parent=1 // pred_region
      _
    $region29: #{generator_forward.1} parent=1 // pred_fallthru
      _
    // Predicated region
    $region30: #{generator_forward.1} parent=1 // pred_check
      _
    $region31: #{generator_forward.1} parent=1 // pred_check_branch
      %30 = sbr.rel (0) target = $region33
    $region32: #{generator_forward.1} parent=1 // pred_region
      _
    $region33: #{generator_forward.1} parent=1 // pred_fallthru
      _
    // Predicated region
    $region34: #{generator_forward.1} parent=1 // pred_check
      _
    $region35: #{generator_forward.1} parent=1 // pred_check_branch
      %32 = sbr.rel (0) target = $region37
    $region36: #{generator_forward.1} parent=1 // pred_region
      _
    $region37: #{generator_forward.1} parent=1 // pred_fallthru
      _
    %v34 = vld [vmem:[%s0] sm:$0xff]
    %v35 = vpack.c.bf16 %v34, %v34
    %v36 = vld [vmem:[%s1] sm:$0xf]
    %v37 = vld [vmem:[%s1 + $0x4] sm:$0xf]
    %v38 = vld [vmem:[%s2] sm:$0x1]
    %v40 = vlaneseq
    %v41 = vshrl.u32 %v40, 7
    %v42 = vsub.s32 0, %v41
    %v43 = vrot.slane %v38, %v42
    %v47 = vunpack.c.l.b16 %v36
    %v48 = vunpack.c.l.b16 %v37
    %v49 = vpack.c.b16 %v48, %v47
    %vm51 = vcmask 130048
    %v53 = vsel %vm51, %v35, 0
    %55 = vmatprep.subr.bf16.mxu0 0
    %56 = vmatpush1.bf16.msra.mxu0 0
    %57 = vmatprep.subr.bf16.mxu0 0
    %58 = vmatpush1.bf16.msra.mxu0 0
    %59 = vmatprep.subr.bf16.mxu0 0
    %60 = vmatpush1.bf16.msra.mxu0 0
    %61 = vmatprep.subr.bf16.mxu0 0
    %62 = vmatpush1.bf16.msra.mxu0 0
    %63 = vmatprep.subr.bf16.mxu0 0
    %64 = vmatpush1.bf16.msra.mxu0 0
    %65 = vmatprep.subr.bf16.mxu0 0
    %66 = vmatpush1.bf16.msra.mxu0 0
    %67 = vmatprep.subr.bf16.mxu0 0
    %68 = vmatpush1.bf16.msra.mxu0 0
    %69 = vmatprep.subr.bf16.mxu0 0
    %70 = vmatpush1.bf16.msra.mxu0 %v49
    %71 = vmatprep.subr.bf16.mxu0 0
    %72 = vmatpush2.bf16.msra.mxu0 0
    %73 = vmatprep.subr.bf16.mxu0 0
    %74 = vmatpush2.bf16.msra.mxu0 0
    %75 = vmatprep.subr.bf16.mxu0 0
    %76 = vmatpush2.bf16.msra.mxu0 0
    %77 = vmatprep.subr.bf16.mxu0 0
    %78 = vmatpush2.bf16.msra.mxu0 0
    %79 = vmatprep.subr.bf16.mxu0 0
    %80 = vmatpush2.bf16.msra.mxu0 0
    %81 = vmatprep.subr.bf16.mxu0 0
    %82 = vmatpush2.bf16.msra.mxu0 0
    %83 = vmatprep.subr.bf16.mxu0 0
    %84 = vmatpush2.bf16.msra.mxu0 0
    %85 = vmatprep.subr.bf16.mxu0 0
    %86 = vmatpush2.bf16.msra.mxu0 0
    %87 = vmatprep.mubr.bf16.mxu0 0
    %88 = vmatmul.mubr.bf16.gmra.mxu0 %v53
    %v89 = vpop.f32.mrf.mxu0
    %v90 = vadd.f32 %v43, %v89
    %v91 = vpop.f32.mrf.mxu0
    %v92 = vpop.f32.mrf.mxu0
    %v93 = vpop.f32.mrf.mxu0
    %94 = vdwg.mxu0
    %vm95 = vcmp.gt.f32.partialorder %v90, 0.0
    %v96 = vmul.f32 %v90, 0.2
    %v97 = vsel %vm95, %v90, %v96
    %v98 = vpack.c.bf16 %v97, %v97
    %v99 = vld [vmem:[%s3] sm:$0xf]
    %v100 = vld [vmem:[%s3 + $0x4] sm:$0xf]
    %v101 = vld [vmem:[%s3 + $0x8] sm:$0xf]
    %v102 = vld [vmem:[%s3 + $0xc] sm:$0xf]
    %v103 = vld [vmem:[%s3 + $0x10] sm:$0xf]
    %v104 = vld [vmem:[%s3 + $0x14] sm:$0xf]
    %v105 = vld [vmem:[%s3 + $0x18] sm:$0xf]
    %v106 = vld [vmem:[%s3 + $0x1c] sm:$0xf]
    %v107 = vld [vmem:[%s3 + $0x20] sm:$0xf]
    %v108 = vld [vmem:[%s3 + $0x24] sm:$0xf]
    %v109 = vld [vmem:[%s3 + $0x28] sm:$0xf]
    %v110 = vld [vmem:[%s3 + $0x2c] sm:$0xf]
    %v111 = vld [vmem:[%s3 + $0x30] sm:$0xf]
    %v112 = vld [vmem:[%s3 + $0x34] sm:$0xf]
    %v113 = vld [vmem:[%s3 + $0x38] sm:$0xf]
    %v114 = vld [vmem:[%s3 + $0x3c] sm:$0xf]
    %v115 = vld [vmem:[%s4] sm:$0x1]
    %v117 = vlaneseq
    %v118 = vshrl.u32 %v117, 7
    %v119 = vsub.s32 0, %v118
    %v120 = vrot.slane %v115, %v119
    %v138 = vunpack.c.l.b16 %v99
    %v139 = vunpack.c.l.b16 %v100
    %v140 = vunpack.c.l.b16 %v101
    %v141 = vunpack.c.l.b16 %v102
    %v142 = vunpack.c.l.b16 %v103
    %v143 = vunpack.c.l.b16 %v104
    %v144 = vunpack.c.l.b16 %v105
    %v145 = vunpack.c.l.b16 %v106
    %v146 = vunpack.c.l.b16 %v107
    %v147 = vunpack.c.l.b16 %v108
    %v148 = vunpack.c.l.b16 %v109
    %v149 = vunpack.c.l.b16 %v110
    %v150 = vunpack.c.l.b16 %v111
    %v151 = vunpack.c.l.b16 %v112
    %v152 = vunpack.c.l.b16 %v113
    %v153 = vunpack.c.l.b16 %v114
    %v154 = vpack.c.b16 %v139, %v138
    %v155 = vpack.c.b16 %v141, %v140
    %v156 = vpack.c.b16 %v143, %v142
    %v157 = vpack.c.b16 %v145, %v144
    %v158 = vpack.c.b16 %v147, %v146
    %v159 = vpack.c.b16 %v149, %v148
    %v160 = vpack.c.b16 %v151, %v150
    %v161 = vpack.c.b16 %v153, %v152
    %170 = vmatprep.subr.bf16.mxu0 0
    %171 = vmatpush1.bf16.msra.mxu0 %v161
    %172 = vmatprep.subr.bf16.mxu0 0
    %173 = vmatpush1.bf16.msra.mxu0 %v160
    %174 = vmatprep.subr.bf16.mxu0 0
    %175 = vmatpush1.bf16.msra.mxu0 %v159
    %176 = vmatprep.subr.bf16.mxu0 0
    %177 = vmatpush1.bf16.msra.mxu0 %v158
    %178 = vmatprep.subr.bf16.mxu0 0
    %179 = vmatpush1.bf16.msra.mxu0 %v157
    %180 = vmatprep.subr.bf16.mxu0 0
    %181 = vmatpush1.bf16.msra.mxu0 %v156
    %182 = vmatprep.subr.bf16.mxu0 0
    %183 = vmatpush1.bf16.msra.mxu0 %v155
    %184 = vmatprep.subr.bf16.mxu0 0
    %185 = vmatpush1.bf16.msra.mxu0 %v154
    %186 = vmatprep.subr.bf16.mxu0 0
    %187 = vmatpush2.bf16.msra.mxu0 0
    %188 = vmatprep.subr.bf16.mxu0 0
    %189 = vmatpush2.bf16.msra.mxu0 0
    %190 = vmatprep.subr.bf16.mxu0 0
    %191 = vmatpush2.bf16.msra.mxu0 0
    %192 = vmatprep.subr.bf16.mxu0 0
    %193 = vmatpush2.bf16.msra.mxu0 0
    %194 = vmatprep.subr.bf16.mxu0 0
    %195 = vmatpush2.bf16.msra.mxu0 0
    %196 = vmatprep.subr.bf16.mxu0 0
    %197 = vmatpush2.bf16.msra.mxu0 0
    %198 = vmatprep.subr.bf16.mxu0 0
    %199 = vmatpush2.bf16.msra.mxu0 0
    %200 = vmatprep.subr.bf16.mxu0 0
    %201 = vmatpush2.bf16.msra.mxu0 0
    %202 = vmatprep.mubr.bf16.mxu0 0
    %203 = vmatmul.mubr.bf16.gmra.mxu0 %v98
    %v204 = vpop.f32.mrf.mxu0
    %v205 = vadd.f32 %v120, %v204
    %v206 = vpop.f32.mrf.mxu0
    %v207 = vpop.f32.mrf.mxu0
    %v208 = vpop.f32.mrf.mxu0
    %209 = vdwg.mxu0
    %vm210 = vcmp.gt.f32.partialorder %v205, 0.0
    %v211 = vmul.f32 %v205, 0.2
    %v212 = vsel %vm210, %v205, %v211
    %v213 = vpack.c.bf16 %v212, %v212
    %v214 = vld [vmem:[%s5] sm:$0xf]
    %v215 = vld [vmem:[%s5 + $0x4] sm:$0xf]
    %v216 = vld [vmem:[%s5 + $0x8] sm:$0xf]
    %v217 = vld [vmem:[%s5 + $0xc] sm:$0xf]
    %v218 = vld [vmem:[%s5 + $0x10] sm:$0xf]
    %v219 = vld [vmem:[%s5 + $0x14] sm:$0xf]
    %v220 = vld [vmem:[%s5 + $0x18] sm:$0xf]
    %v221 = vld [vmem:[%s5 + $0x1c] sm:$0xf]
    %v222 = vld [vmem:[%s5 + $0x20] sm:$0xf]
    %v223 = vld [vmem:[%s5 + $0x24] sm:$0xf]
    %v224 = vld [vmem:[%s5 + $0x28] sm:$0xf]
    %v225 = vld [vmem:[%s5 + $0x2c] sm:$0xf]
    %v226 = vld [vmem:[%s5 + $0x30] sm:$0xf]
    %v227 = vld [vmem:[%s5 + $0x34] sm:$0xf]
    %v228 = vld [vmem:[%s5 + $0x38] sm:$0xf]
    %v229 = vld [vmem:[%s5 + $0x3c] sm:$0xf]
    %v230 = vld [vmem:[%s6] sm:$0x1]
    %v232 = vlaneseq
    %v233 = vshrl.u32 %v232, 7
    %v234 = vsub.s32 0, %v233
    %v235 = vrot.slane %v230, %v234
    %v253 = vunpack.c.l.b16 %v214
    %v254 = vunpack.c.l.b16 %v215
    %v255 = vunpack.c.l.b16 %v216
    %v256 = vunpack.c.l.b16 %v217
    %v257 = vunpack.c.l.b16 %v218
    %v258 = vunpack.c.l.b16 %v219
    %v259 = vunpack.c.l.b16 %v220
    %v260 = vunpack.c.l.b16 %v221
    %v261 = vunpack.c.l.b16 %v222
    %v262 = vunpack.c.l.b16 %v223
    %v263 = vunpack.c.l.b16 %v224
    %v264 = vunpack.c.l.b16 %v225
    %v265 = vunpack.c.l.b16 %v226
    %v266 = vunpack.c.l.b16 %v227
    %v267 = vunpack.c.l.b16 %v228
    %v268 = vunpack.c.l.b16 %v229
    %v269 = vpack.c.b16 %v254, %v253
    %v270 = vpack.c.b16 %v256, %v255
    %v271 = vpack.c.b16 %v258, %v257
    %v272 = vpack.c.b16 %v260, %v259
    %v273 = vpack.c.b16 %v262, %v261
    %v274 = vpack.c.b16 %v264, %v263
    %v275 = vpack.c.b16 %v266, %v265
    %v276 = vpack.c.b16 %v268, %v267
    %285 = vmatprep.subr.bf16.mxu0 0
    %286 = vmatpush1.bf16.msra.mxu0 %v276
    %287 = vmatprep.subr.bf16.mxu0 0
    %288 = vmatpush1.bf16.msra.mxu0 %v275
    %289 = vmatprep.subr.bf16.mxu0 0
    %290 = vmatpush1.bf16.msra.mxu0 %v274
    %291 = vmatprep.subr.bf16.mxu0 0
    %292 = vmatpush1.bf16.msra.mxu0 %v273
    %293 = vmatprep.subr.bf16.mxu0 0
    %294 = vmatpush1.bf16.msra.mxu0 %v272
    %295 = vmatprep.subr.bf16.mxu0 0
    %296 = vmatpush1.bf16.msra.mxu0 %v271
    %297 = vmatprep.subr.bf16.mxu0 0
    %298 = vmatpush1.bf16.msra.mxu0 %v270
    %299 = vmatprep.subr.bf16.mxu0 0
    %300 = vmatpush1.bf16.msra.mxu0 %v269
    %301 = vmatprep.subr.bf16.mxu0 0
    %302 = vmatpush2.bf16.msra.mxu0 0
    %303 = vmatprep.subr.bf16.mxu0 0
    %304 = vmatpush2.bf16.msra.mxu0 0
    %305 = vmatprep.subr.bf16.mxu0 0
    %306 = vmatpush2.bf16.msra.mxu0 0
    %307 = vmatprep.subr.bf16.mxu0 0
    %308 = vmatpush2.bf16.msra.mxu0 0
    %309 = vmatprep.subr.bf16.mxu0 0
    %310 = vmatpush2.bf16.msra.mxu0 0
    %311 = vmatprep.subr.bf16.mxu0 0
    %312 = vmatpush2.bf16.msra.mxu0 0
    %313 = vmatprep.subr.bf16.mxu0 0
    %314 = vmatpush2.bf16.msra.mxu0 0
    %315 = vmatprep.subr.bf16.mxu0 0
    %316 = vmatpush2.bf16.msra.mxu0 0
    %317 = vmatprep.mubr.bf16.mxu0 0
    %318 = vmatmul.mubr.bf16.gmra.mxu0 %v213
    %v319 = vpop.f32.mrf.mxu0
    %v320 = vadd.f32 %v235, %v319
    %v321 = vpop.f32.mrf.mxu0
    %v322 = vpop.f32.mrf.mxu0
    %v323 = vpop.f32.mrf.mxu0
    %324 = vdwg.mxu0
    %vm325 = vcmp.gt.f32.partialorder %v320, 0.0
    %v326 = vmul.f32 %v320, 0.2
    %v327 = vsel %vm325, %v320, %v326
    %v328 = vpack.c.bf16 %v327, %v327
    %v329 = vld [vmem:[%s7] sm:$0xf]
    %v330 = vld [vmem:[%s7 + $0x4] sm:$0xf]
    %v331 = vld [vmem:[%s7 + $0x8] sm:$0xf]
    %v332 = vld [vmem:[%s7 + $0xc] sm:$0xf]
    %v333 = vld [vmem:[%s7 + $0x10] sm:$0xf]
    %v334 = vld [vmem:[%s7 + $0x14] sm:$0xf]
    %v335 = vld [vmem:[%s7 + $0x18] sm:$0xf]
    %v336 = vld [vmem:[%s7 + $0x1c] sm:$0xf]
    %v337 = vld [vmem:[%s7 + $0x20] sm:$0xf]
    %v338 = vld [vmem:[%s7 + $0x24] sm:$0xf]
    %v339 = vld [vmem:[%s7 + $0x28] sm:$0xf]
    %v340 = vld [vmem:[%s7 + $0x2c] sm:$0xf]
    %v341 = vld [vmem:[%s7 + $0x30] sm:$0xf]
    %v342 = vld [vmem:[%s7 + $0x34] sm:$0xf]
    %v343 = vld [vmem:[%s7 + $0x38] sm:$0xf]
    %v344 = vld [vmem:[%s7 + $0x3c] sm:$0xf]
    %v345 = vld [vmem:[%s8] sm:$0x1]
    %v347 = vlaneseq
    %v348 = vshrl.u32 %v347, 7
    %v349 = vsub.s32 0, %v348
    %v350 = vrot.slane %v345, %v349
    %v368 = vunpack.c.l.b16 %v329
    %v369 = vunpack.c.l.b16 %v330
    %v370 = vunpack.c.l.b16 %v331
    %v371 = vunpack.c.l.b16 %v332
    %v372 = vunpack.c.l.b16 %v333
    %v373 = vunpack.c.l.b16 %v334
    %v374 = vunpack.c.l.b16 %v335
    %v375 = vunpack.c.l.b16 %v336
    %v376 = vunpack.c.l.b16 %v337
    %v377 = vunpack.c.l.b16 %v338
    %v378 = vunpack.c.l.b16 %v339
    %v379 = vunpack.c.l.b16 %v340
    %v380 = vunpack.c.l.b16 %v341
    %v381 = vunpack.c.l.b16 %v342
    %v382 = vunpack.c.l.b16 %v343
    %v383 = vunpack.c.l.b16 %v344
    %v384 = vpack.c.b16 %v369, %v368
    %v385 = vpack.c.b16 %v371, %v370
    %v386 = vpack.c.b16 %v373, %v372
    %v387 = vpack.c.b16 %v375, %v374
    %v388 = vpack.c.b16 %v377, %v376
    %v389 = vpack.c.b16 %v379, %v378
    %v390 = vpack.c.b16 %v381, %v380
    %v391 = vpack.c.b16 %v383, %v382
    %400 = vmatprep.subr.bf16.mxu0 0
    %401 = vmatpush1.bf16.msra.mxu0 %v391
    %402 = vmatprep.subr.bf16.mxu0 0
    %403 = vmatpush1.bf16.msra.mxu0 %v390
    %404 = vmatprep.subr.bf16.mxu0 0
    %405 = vmatpush1.bf16.msra.mxu0 %v389
    %406 = vmatprep.subr.bf16.mxu0 0
    %407 = vmatpush1.bf16.msra.mxu0 %v388
    %408 = vmatprep.subr.bf16.mxu0 0
    %409 = vmatpush1.bf16.msra.mxu0 %v387
    %410 = vmatprep.subr.bf16.mxu0 0
    %411 = vmatpush1.bf16.msra.mxu0 %v386
    %412 = vmatprep.subr.bf16.mxu0 0
    %413 = vmatpush1.bf16.msra.mxu0 %v385
    %414 = vmatprep.subr.bf16.mxu0 0
    %415 = vmatpush1.bf16.msra.mxu0 %v384
    %416 = vmatprep.subr.bf16.mxu0 0
    %417 = vmatpush2.bf16.msra.mxu0 0
    %418 = vmatprep.subr.bf16.mxu0 0
    %419 = vmatpush2.bf16.msra.mxu0 0
    %420 = vmatprep.subr.bf16.mxu0 0
    %421 = vmatpush2.bf16.msra.mxu0 0
    %422 = vmatprep.subr.bf16.mxu0 0
    %423 = vmatpush2.bf16.msra.mxu0 0
    %424 = vmatprep.subr.bf16.mxu0 0
    %425 = vmatpush2.bf16.msra.mxu0 0
    %426 = vmatprep.subr.bf16.mxu0 0
    %427 = vmatpush2.bf16.msra.mxu0 0
    %428 = vmatprep.subr.bf16.mxu0 0
    %429 = vmatpush2.bf16.msra.mxu0 0
    %430 = vmatprep.subr.bf16.mxu0 0
    %431 = vmatpush2.bf16.msra.mxu0 0
    %432 = vmatprep.mubr.bf16.mxu0 0
    %433 = vmatmul.mubr.bf16.gmra.mxu0 %v328
    %v434 = vpop.f32.mrf.mxu0
    %v435 = vadd.f32 %v350, %v434
    %v436 = vpop.f32.mrf.mxu0
    %v437 = vpop.f32.mrf.mxu0
    %v438 = vpop.f32.mrf.mxu0
    %439 = vdwg.mxu0
    %v440 = vtanh.pop %v435
    %v441 = vpack.c.bf16 %v440, %v440
    %vm442 = vcmask 125952
    %443 = vst.msk [vmem:[#allocation2] sm:$0xf] %vm442, %v441
    // Predicated region
    $region38: #{generator_forward.1} parent=1 // pred_check
      _
    $region39: #{generator_forward.1} parent=1 // pred_check_branch
      %445 = sbr.rel (0) target = $region41
    $region40: #{generator_forward.1} parent=1 // pred_region
      %s447 = ssub.s32 64, 64
      %448 = vsyncadd [#allocation3], %s447
      %s450 = sshll.u32 [#allocation2], 4
      %s451 = int_to_ptr.vmem [resolvable:$true] %s450
      %453 = dma.vmem_to_hbm [thread:$0]  %s451, 64, %s9, [#allocation3]
    $region41: #{generator_forward.1} parent=1 // pred_fallthru
      _
    // Predicated region
    $region42: #{generator_forward.1} parent=1 // pred_check
      _
    $region43: #{generator_forward.1} parent=1 // pred_check_branch
      %455 = sbr.rel (0) target = $region45
    $region44: #{generator_forward.1} parent=1 // pred_region
      %456 = dma.done [#allocation3], 64
    $region45: #{generator_forward.1} parent=1 // pred_fallthru
      _
    %457 = vsyncpa [#allocation3], 1

</llo_original>
